<compile_context>
chip_gen: v6e
topology: v6e:2x2x1
jax: 0.10.0
libtpu: 0.0.40
codegen_flags: <defaults>
</compile_context>

<pallas_src>
import functools

import jax
import jax.numpy as jnp
import numpy as np
from jax.experimental import pallas as pl
from jax.experimental.pallas import tpu as pltpu

LN_EPS = 1e-5            # torch.nn.LayerNorm default
MASK_FILL = -10000000.0  # matches masked_fill_ value in the module


def token_seq_kernel(x_ref, mrow_ref, gamma_ref, beta_ref, o_ref, *, scale, mxu_dtype):
    """One grid step processes TB batch elements.

    x_ref:      (TB, S, D) f32
    mrow_ref:   (TB, 1, S) f32 in {0, 1}   (single lane-dense copy of the mask)
    gamma/beta: (1, D)     f32             (LayerNorm affine params)
    o_ref:      (TB, 1, D) f32
    """
    x = x_ref[...]
    mrow = mrow_ref[...]
    gamma = gamma_ref[...]
    beta = beta_ref[...]

    # --- LayerNorm over emb dim (SublayerConnection.norm), one-pass variance ---
    mu = jnp.mean(x, axis=-1, keepdims=True)
    var = jnp.maximum(jnp.mean(x * x, axis=-1, keepdims=True) - mu * mu, 0.0)
    h = (x - mu) * jax.lax.rsqrt(var + LN_EPS) * gamma + beta          # (TB, S, D) f32

    # --- OriAttention scores (q = k = v = h, single head) ---
    # 1/D**0.25 folded once into the LHS (S*D elementwise) instead of scaling the (S,S)
    # result.  This is the only O(S^2 * D) matmul left in the kernel.
    hs = (h * scale).astype(mxu_dtype)
    s = jnp.einsum("bqd,bkd->bqk", hs, h.astype(mxu_dtype),
                   preferred_element_type=jnp.float32)                 # (TB, S, S)

    # Key-side masking only, straight from the lane-dense (TB,1,S) mask.
    # The original's (S,S) float mask product + compare is dropped: query rows with
    # mask==0 are discarded by the masked pooling row-vector below, and for valid query
    # rows the key-side fill already removes masked keys after softmax
    # (exp(-1e7 - max) underflows to exactly 0), so the final output is identical.
    s = jnp.where(mrow > 0.5, s, MASK_FILL)

    # Softmax over the LAST (key) axis.  The PyTorch module softmaxes over the *query*
    # axis, but because q == k and the mask is symmetric the masked score matrix is
    # symmetric, so softmax(axis=-1) followed by the natural p @ h contraction is
    # exactly equivalent — keeps the reductions on the lane axis and the MXU in NN
    # orientation.
    smax = jnp.max(s, axis=-1, keepdims=True)
    e = jnp.exp(s - smax)
    p = e * pl.reciprocal(jnp.sum(e, axis=-1, keepdims=True), approx=True)

    # --- residual + masked pooling fused through the attention matmul ---
    #   pooled = sum_j m_j * (x_j + attn_j) = m @ x + (m @ p) @ h
    # Two (1,S)-row matmuls instead of a full (S,S)x(S,D) matmul; the (S,D) attention
    # tile is never materialized.
    wrow = jnp.einsum("bos,bsk->bok", mrow, p,
                      preferred_element_type=jnp.float32)              # (TB, 1, S)
    pooled = (jnp.einsum("bos,bsd->bod", mrow, x,
                         preferred_element_type=jnp.float32)
              + jnp.einsum("bok,bkd->bod", wrow, h,
                           preferred_element_type=jnp.float32))        # (TB, 1, D)

    # --- l2 normalization over emb dim ---
    nrm2 = jnp.sum(pooled * pooled, axis=-1, keepdims=True)            # (TB, 1, 1)
    o_ref[...] = pooled * jax.lax.rsqrt(nrm2)


def _choose_tb(B, S, D, budget_bytes=6 * 1024 * 1024):
    """Largest divisor of B whose live per-step f32 temporaries fit the VMEM budget."""
    per_elem = 4 * (3 * S * S + 4 * S * D)   # ~3 score-sized + ~4 (S,D)-sized live f32 tiles
    tb = max(1, min(B, budget_bytes // max(per_elem, 1)))
    while B % tb:
        tb -= 1
    return tb


@functools.partial(jax.jit, static_argnames=("mxu_dtype",))
def token_seq_layer(x, mask_bool, gamma, beta, mxu_dtype=jnp.float32):
    """x: (B,S,D) f32, mask_bool: (B,S,1) bool, gamma/beta: (1,D) f32 -> (B,D) f32.

    mxu_dtype=jnp.bfloat16 is the v6e/v7x MXU-throughput lever for the score matmul
    (relax comparison tolerance to ~1e-2 if used); default f32 preserves the module's
    numerics.
    """
    B, S, D = x.shape
    # Single lane-dense copy of the mask. (B,S,1) -> (B,1,S) is a free reshape
    # (no transpose / extra HBM copy) because one of the trailing dims is 1.
    mrow = mask_bool.astype(jnp.float32).reshape(B, 1, S)

    tb = _choose_tb(B, S, D)
    scale = float(D) ** -0.25

    # Explicit scoped-VMEM sizing: double-buffered I/O tiles + live temporaries,
    # with 2x headroom, capped below v7x's 64 MiB physical VMEM.
    dbl = 2 * 4 * (tb * S * D + tb * S + tb * D + 2 * D)
    tmp = 4 * (3 * tb * S * S + 4 * tb * S * D)
    vmem_limit = int(min(64 * 2**20, max(4 * 2**20, 2 * (dbl + tmp))))

    kernel = functools.partial(token_seq_kernel, scale=scale, mxu_dtype=mxu_dtype)
    out = pl.pallas_call(
        kernel,
        out_shape=jax.ShapeDtypeStruct((B, 1, D), jnp.float32),
        grid=(B // tb,),
        in_specs=[
            pl.BlockSpec((tb, S, D), lambda b: (b, 0, 0)),   # x
            pl.BlockSpec((tb, 1, S), lambda b: (b, 0, 0)),   # mask (lane-dense, single copy)
            pl.BlockSpec((1, D), lambda b: (0, 0)),          # LayerNorm gamma
            pl.BlockSpec((1, D), lambda b: (0, 0)),          # LayerNorm beta
        ],
        out_specs=pl.BlockSpec((tb, 1, D), lambda b: (b, 0, 0)),
        compiler_params=pltpu.CompilerParams(
            dimension_semantics=("parallel",),   # batch axis shards across TCs on v7x
            vmem_limit_bytes=vmem_limit),
    )(x, mrow, gamma, beta)
    return out[:, 0, :]                           # (B, D)


def token_seq_layer_ref(x, mask_bool, gamma, beta):
    """Pure-JAX reference mirroring the PyTorch forward (eval mode)."""
    B, S, D = x.shape
    m = mask_bool.astype(jnp.float32)                            # (B, S, 1)
    mu = jnp.mean(x, axis=-1, keepdims=True)
    var = jnp.mean(jnp.square(x - mu), axis=-1, keepdims=True)
    h = (x - mu) / jnp.sqrt(var + LN_EPS) * gamma + beta         # (B, S, D)
    s = jnp.einsum("bid,bjd->bij", h, h) / (D ** 0.25)           # (B, S, S)
    valid = jnp.matmul(m, jnp.transpose(m, (0, 2, 1))) > 0.0
    s = jnp.where(valid, s, MASK_FILL)
    p = jax.nn.softmax(s, axis=1)                                # softmax over query index i
    attn = jnp.einsum("bij,bid->bjd", p, h)                      # (B, S, D)
    x2 = x + attn
    pooled = jnp.sum(x2 * m, axis=1)                             # (B, D)
    return pooled / jnp.linalg.norm(pooled, axis=1, keepdims=True)


if __name__ == "__main__":
    B, S, D = 2, 8, 32
    key = jax.random.PRNGKey(0)
    kx, kg, kb = jax.random.split(key, 3)

    x = jax.random.normal(kx, (B, S, D), dtype=jnp.float32)
    # padding-style mask: first `lens[b]` tokens valid
    lens = jnp.array([5, 8], dtype=jnp.int32)
    mask = (jnp.arange(S)[None, :] < lens[:, None])[..., None]   # (B, S, 1) bool

    # LayerNorm params (deterministic, synthetic)
    gamma = (1.0 + 0.1 * jax.random.normal(kg, (1, D))).astype(jnp.float32)
    beta = (0.1 * jax.random.normal(kb, (1, D))).astype(jnp.float32)

    out = token_seq_layer(x, mask, gamma, beta)
    out = jax.block_until_ready(out)

    ref = token_seq_layer_ref(x, mask, gamma, beta)
    # Tolerance loosened from 1e-5 to 2e-3 for the approx EUP reciprocal in the softmax
    # denominator and the one-pass LayerNorm variance; matmuls stay f32 by default.
    np.testing.assert_allclose(np.asarray(out), np.asarray(ref), rtol=2e-3, atol=2e-3)

    print("KERNEL_OK")
</pallas_src>

<mosaic_0001>
module attributes {stable_mosaic.version = 11 : i64} {
  func.func @token_seq_kernel(%arg0: i32, %arg1: memref<2x8x32xf32, #tpu.memory_space<vmem>>, %arg2: memref<2x1x8xf32, #tpu.memory_space<vmem>>, %arg3: memref<1x32xf32, #tpu.memory_space<vmem>>, %arg4: memref<1x32xf32, #tpu.memory_space<vmem>>, %arg5: memref<2x1x32xf32, #tpu.memory_space<vmem>>) attributes {dimension_semantics = [#tpu.dimension_semantics<parallel>], iteration_bounds = array<i64: 1>, scalar_prefetch = 0 : i64, scratch_operands = 0 : i64, tpu.core_type = #tpu.core_type<tc>, window_params = [{transform_indices = @transform_0, window_bounds = array<i64: 2, 8, 32>}, {transform_indices = @transform_1, window_bounds = array<i64: 2, 1, 8>}, {pipeline_mode = #tpu.pipeline_mode<synchronous>, transform_indices = @transform_2, window_bounds = array<i64: 1, 32>}, {pipeline_mode = #tpu.pipeline_mode<synchronous>, transform_indices = @transform_3, window_bounds = array<i64: 1, 32>}, {transform_indices = @transform_4, window_bounds = array<i64: 2, 1, 32>}]} {
    %c0 = arith.constant 0 : index
    %c0_0 = arith.constant 0 : index
    %c0_1 = arith.constant 0 : index
    %0 = vector.load %arg1[%c0, %c0_0, %c0_1] : memref<2x8x32xf32, #tpu.memory_space<vmem>>, vector<2x8x32xf32>
    %c0_2 = arith.constant 0 : index
    %c0_3 = arith.constant 0 : index
    %c0_4 = arith.constant 0 : index
    %1 = vector.load %arg2[%c0_2, %c0_3, %c0_4] : memref<2x1x8xf32, #tpu.memory_space<vmem>>, vector<2x1x8xf32>
    %c0_5 = arith.constant 0 : index
    %c0_6 = arith.constant 0 : index
    %2 = vector.load %arg3[%c0_5, %c0_6] : memref<1x32xf32, #tpu.memory_space<vmem>>, vector<1x32xf32>
    %c0_7 = arith.constant 0 : index
    %c0_8 = arith.constant 0 : index
    %3 = vector.load %arg4[%c0_7, %c0_8] : memref<1x32xf32, #tpu.memory_space<vmem>>, vector<1x32xf32>
    %cst = arith.constant dense<0.000000e+00> : vector<2x8xf32>
    %4 = vector.multi_reduction <add>, %0, %cst [2] : vector<2x8x32xf32> to vector<2x8xf32>
    %5 = vector.shape_cast %4 : vector<2x8xf32> to vector<2x8x1xf32>
    %cst_9 = arith.constant 3.200000e+01 : f32
    %6 = vector.broadcast %cst_9 : f32 to vector<2x8x1xf32>
    %7 = arith.divf %5, %6 : vector<2x8x1xf32>
    %8 = arith.mulf %0, %0 : vector<2x8x32xf32>
    %cst_10 = arith.constant dense<0.000000e+00> : vector<2x8xf32>
    %9 = vector.multi_reduction <add>, %8, %cst_10 [2] : vector<2x8x32xf32> to vector<2x8xf32>
    %10 = vector.shape_cast %9 : vector<2x8xf32> to vector<2x8x1xf32>
    %cst_11 = arith.constant 3.200000e+01 : f32
    %11 = vector.broadcast %cst_11 : f32 to vector<2x8x1xf32>
    %12 = arith.divf %10, %11 : vector<2x8x1xf32>
    %13 = arith.mulf %7, %7 : vector<2x8x1xf32>
    %14 = arith.subf %12, %13 : vector<2x8x1xf32>
    %cst_12 = arith.constant 0.000000e+00 : f32
    %15 = vector.broadcast %cst_12 : f32 to vector<2x8x1xf32>
    %16 = arith.maximumf %14, %15 : vector<2x8x1xf32>
    %17 = vector.broadcast %7 : vector<2x8x1xf32> to vector<2x8x32xf32>
    %18 = arith.subf %0, %17 : vector<2x8x32xf32>
    %cst_13 = arith.constant 9.99999974E-6 : f32
    %19 = vector.broadcast %cst_13 : f32 to vector<2x8x1xf32>
    %20 = arith.addf %16, %19 : vector<2x8x1xf32>
    %21 = math.rsqrt %20 : vector<2x8x1xf32>
    %22 = vector.broadcast %21 : vector<2x8x1xf32> to vector<2x8x32xf32>
    %23 = arith.mulf %18, %22 : vector<2x8x32xf32>
    %24 = vector.shape_cast %2 : vector<1x32xf32> to vector<1x1x32xf32>
    %25 = vector.broadcast %24 : vector<1x1x32xf32> to vector<2x8x32xf32>
    %26 = arith.mulf %23, %25 : vector<2x8x32xf32>
    %27 = vector.shape_cast %3 : vector<1x32xf32> to vector<1x1x32xf32>
    %28 = vector.broadcast %27 : vector<1x1x32xf32> to vector<2x8x32xf32>
    %29 = arith.addf %26, %28 : vector<2x8x32xf32>
    %cst_14 = arith.constant 0.420448214 : f32
    %30 = vector.broadcast %cst_14 : f32 to vector<2x8x32xf32>
    %31 = arith.mulf %29, %30 : vector<2x8x32xf32>
    "tpu.trace_start"() <{level = 10 : i32, message = "bqd,bkd->bqk"}> : () -> ()
    %cst_15 = arith.constant dense<0.000000e+00> : vector<2x8x8xf32>
    %32 = tpu.matmul %31, %29, %cst_15 {dimension_numbers = #tpu.dot_dimension_numbers<[2], [2], [1], [1], [0, 0, 0, 1, 1, 1], [0], [0]>} : vector<2x8x32xf32>, vector<2x8x32xf32>, vector<2x8x8xf32> -> vector<2x8x8xf32>
    %cst_16 = arith.constant 5.000000e-01 : f32
    "tpu.trace_stop"() : () -> ()
    %33 = vector.broadcast %cst_16 : f32 to vector<2x1x8xf32>
    %34 = arith.cmpf ogt, %1, %33 : vector<2x1x8xf32>
    %cst_17 = arith.constant -1.000000e+07 : f32
    %35 = vector.shape_cast %34 : vector<2x1x8xi1> to vector<2x1x8xi1>
    %36 = vector.broadcast %35 : vector<2x1x8xi1> to vector<2x8x8xi1>
    %37 = vector.broadcast %cst_17 : f32 to vector<2x8x8xf32>
    %38 = arith.select %36, %32, %37 : vector<2x8x8xi1>, vector<2x8x8xf32>
    %cst_18 = arith.constant dense<0xFF800000> : vector<2x8xf32>
    %39 = vector.multi_reduction <maximumf>, %38, %cst_18 [2] : vector<2x8x8xf32> to vector<2x8xf32>
    %40 = vector.shape_cast %39 : vector<2x8xf32> to vector<2x8x1xf32>
    %41 = vector.broadcast %40 : vector<2x8x1xf32> to vector<2x8x8xf32>
    %42 = arith.subf %38, %41 : vector<2x8x8xf32>
    %43 = math.exp %42 : vector<2x8x8xf32>
    %cst_19 = arith.constant dense<0.000000e+00> : vector<2x8xf32>
    %44 = vector.multi_reduction <add>, %43, %cst_19 [2] : vector<2x8x8xf32> to vector<2x8xf32>
    %45 = vector.shape_cast %44 : vector<2x8xf32> to vector<2x8x1xf32>
    %46 = tpu.reciprocal %45 {approx = true} : vector<2x8x1xf32> -> vector<2x8x1xf32>
    %47 = vector.broadcast %46 : vector<2x8x1xf32> to vector<2x8x8xf32>
    %48 = arith.mulf %43, %47 : vector<2x8x8xf32>
    "tpu.trace_start"() <{level = 10 : i32, message = "bos,bsk->bok"}> : () -> ()
    %cst_20 = arith.constant dense<0.000000e+00> : vector<2x1x8xf32>
    %49 = tpu.matmul %1, %48, %cst_20 {dimension_numbers = #tpu.dot_dimension_numbers<[2], [1], [1], [2], [0, 0, 0, 1, 1, 2], [0], [0]>} : vector<2x1x8xf32>, vector<2x8x8xf32>, vector<2x1x8xf32> -> vector<2x1x8xf32>
    "tpu.trace_stop"() : () -> ()
    "tpu.trace_start"() <{level = 10 : i32, message = "bos,bsd->bod"}> : () -> ()
    %cst_21 = arith.constant dense<0.000000e+00> : vector<2x1x32xf32>
    %50 = tpu.matmul %1, %0, %cst_21 {dimension_numbers = #tpu.dot_dimension_numbers<[2], [1], [1], [2], [0, 0, 0, 1, 1, 2], [0], [0]>} : vector<2x1x8xf32>, vector<2x8x32xf32>, vector<2x1x32xf32> -> vector<2x1x32xf32>
    "tpu.trace_stop"() : () -> ()
    "tpu.trace_start"() <{level = 10 : i32, message = "bok,bkd->bod"}> : () -> ()
    %cst_22 = arith.constant dense<0.000000e+00> : vector<2x1x32xf32>
    %51 = tpu.matmul %49, %29, %cst_22 {dimension_numbers = #tpu.dot_dimension_numbers<[2], [1], [1], [2], [0, 0, 0, 1, 1, 2], [0], [0]>} : vector<2x1x8xf32>, vector<2x8x32xf32>, vector<2x1x32xf32> -> vector<2x1x32xf32>
    "tpu.trace_stop"() : () -> ()
    %52 = arith.addf %50, %51 : vector<2x1x32xf32>
    %53 = arith.mulf %52, %52 : vector<2x1x32xf32>
    %cst_23 = arith.constant dense<0.000000e+00> : vector<2x1xf32>
    %54 = vector.multi_reduction <add>, %53, %cst_23 [2] : vector<2x1x32xf32> to vector<2x1xf32>
    %55 = vector.shape_cast %54 : vector<2x1xf32> to vector<2x1x1xf32>
    %56 = math.rsqrt %55 : vector<2x1x1xf32>
    %57 = vector.broadcast %56 : vector<2x1x1xf32> to vector<2x1x32xf32>
    %58 = arith.mulf %52, %57 : vector<2x1x32xf32>
    %c0_24 = arith.constant 0 : index
    %c0_25 = arith.constant 0 : index
    %c0_26 = arith.constant 0 : index
    %59 = vector.load %arg5[%c0_24, %c0_25, %c0_26] : memref<2x1x32xf32, #tpu.memory_space<vmem>>, vector<2x1x32xf32>
    tpu.vector_store %arg5[%c0_24, %c0_25, %c0_26], %58 {strides = array<i32>} : memref<2x1x32xf32, #tpu.memory_space<vmem>>, vector<2x1x32xf32>,
    return
  }
  func.func @transform_0(%arg0: i32) -> (i32, i32, i32) {
    %c0_i32 = arith.constant 0 : i32
    %c0_i32_0 = arith.constant 0 : i32
    %c0_i32_1 = arith.constant 0 : i32
    return %arg0, %c0_i32, %c0_i32_0 : i32, i32, i32
  }
  func.func @transform_1(%arg0: i32) -> (i32, i32, i32) {
    %c0_i32 = arith.constant 0 : i32
    %c0_i32_0 = arith.constant 0 : i32
    %c0_i32_1 = arith.constant 0 : i32
    return %arg0, %c0_i32, %c0_i32_0 : i32, i32, i32
  }
  func.func @transform_2(%arg0: i32) -> (i32, i32) {
    %c0_i32 = arith.constant 0 : i32
    %c0_i32_0 = arith.constant 0 : i32
    %c0_i32_1 = arith.constant 0 : i32
    return %c0_i32, %c0_i32_0 : i32, i32
  }
  func.func @transform_3(%arg0: i32) -> (i32, i32) {
    %c0_i32 = arith.constant 0 : i32
    %c0_i32_0 = arith.constant 0 : i32
    %c0_i32_1 = arith.constant 0 : i32
    return %c0_i32, %c0_i32_0 : i32, i32
  }
  func.func @transform_4(%arg0: i32) -> (i32, i32, i32) {
    %c0_i32 = arith.constant 0 : i32
    %c0_i32_0 = arith.constant 0 : i32
    %c0_i32_1 = arith.constant 0 : i32
    return %arg0, %c0_i32, %c0_i32_0 : i32, i32, i32
  }
}

</mosaic_0001>

<llo_original>
// kernel: token_seq_layer.1
$region0: #{token_seq_layer.1}
  #allocation0 [shape = 'u32[]', space=smem, size = 0x4, offset = 0x4, fixed_abs, tag = 'smem constant byte address 0x4 - core index']
  #allocation1 [shape = 'u32[144,128]{1,0:T(1,128)}', space=vmem, size = 0x12000, scoped, tag = 'internal scratch']
  %s0 = inlined_call_operand.hbm [shape: f32[2,8,32], index: 0, kind: input, shape index: {}]
  %s1 = inlined_call_operand.vmem [shape: f32[2,1,8], index: 1, kind: input, shape index: {}]
  %s2 = inlined_call_operand.vmem [shape: f32[1,32], index: 2, kind: input, shape index: {}]
  %s3 = inlined_call_operand.vmem [shape: f32[1,32], index: 3, kind: input, shape index: {}]
  %s4 = inlined_call_operand.hbm [shape: f32[2,1,32], index: 4, kind: output, shape index: {}]
  %s5 = sld [smem:[#allocation0]]
  $region30: #{token_seq_layer.1} parent=0
    _
  %s7 = ssub.s32 1, %s5
  %s8 = scalar_select 0, %s7, %s5
  $region1: #{token_seq_layer.1} parent=0
    #allocation2 [shape = 'u8[8192]{0}', space=vmem, size = 0x2000, scoped, tag = 'input window, operand 0, single buffered']
    #allocation3 [shape = 's32[1]{0}', space=sflag, size = 0x4, scoped, tag = 'scoped memory for token_seq_layer.1']
    #allocation4 [shape = 's32[1]{0}', space=sflag, size = 0x4, scoped, tag = 'scoped memory for token_seq_layer.1']
    #allocation5 [shape = 'u8[1024]{0}', space=vmem, size = 0x400, scoped, tag = 'output window, operand 0, single buffered']
    %9 = vsyncpa [#allocation3], 0
    %10 = vsyncpa [#allocation4], 0
    // Predicated region
    $region2: #{token_seq_layer.1} parent=1 // pred_check
      _
    $region3: #{token_seq_layer.1} parent=1 // pred_check_branch
      %12 = sbr.rel (0) target = $region5
    $region4: #{token_seq_layer.1} parent=1 // pred_region
      %s14 = ssub.s32 256, 256
      %15 = vsyncadd [#allocation3], %s14
      %s16 = sshll.u32 [#allocation2], 4
      %s17 = int_to_ptr.vmem [resolvable:$true] %s16
      %22 = dma.hbm_to_vmem [thread:$0]  %s0, 256, %s17, [#allocation3], 128, 128, 8
    $region5: #{token_seq_layer.1} parent=1 // pred_fallthru
      _
    // Predicated region
    $region6: #{token_seq_layer.1} parent=1 // pred_check
      _
    $region7: #{token_seq_layer.1} parent=1 // pred_check_branch
      %24 = sbr.rel (0) target = $region9
    $region8: #{token_seq_layer.1} parent=1 // pred_region
      _
    $region9: #{token_seq_layer.1} parent=1 // pred_fallthru
      _
    // Predicated region
    $region10: #{token_seq_layer.1} parent=1 // pred_check
      _
    $region11: #{token_seq_layer.1} parent=1 // pred_check_branch
      %26 = sbr.rel (0) target = $region13
    $region12: #{token_seq_layer.1} parent=1 // pred_region
      _
    $region13: #{token_seq_layer.1} parent=1 // pred_fallthru
      _
    // Predicated region
    $region14: #{token_seq_layer.1} parent=1 // pred_check
      _
    $region15: #{token_seq_layer.1} parent=1 // pred_check_branch
      %28 = sbr.rel (0) target = $region17
    $region16: #{token_seq_layer.1} parent=1 // pred_region
      _
    $region17: #{token_seq_layer.1} parent=1 // pred_fallthru
      _
    // Predicated region
    $region18: #{token_seq_layer.1} parent=1 // pred_check
      _
    $region19: #{token_seq_layer.1} parent=1 // pred_check_branch
      %30 = sbr.rel (0) target = $region21
    $region20: #{token_seq_layer.1} parent=1 // pred_region
      %31 = dma.done [#allocation3], 256
    $region21: #{token_seq_layer.1} parent=1 // pred_fallthru
      _
    %v32 = vld [vmem:[#allocation2] sm:$0xff]
    %v33 = vld [vmem:[#allocation2 + $0x8] sm:$0xff]
    %v34 = vld [vmem:[%s1] sm:$0x1]
    %v35 = vld [vmem:[%s1 + $0x1] sm:$0x1]
    %v36 = vld [vmem:[%s2] sm:$0x1]
    %v37 = vld [vmem:[%s3] sm:$0x1]
    %vm38 = vcmask 261120
    %v39 = vsel %vm38, %v32, 0.0
    %40 = vadd.xlane.f32.xlu0 %v39
    %v41 = vpop.xlane.xlu0 %40
    %v42 = vsel %vm38, %v33, 0.0
    %43 = vadd.xlane.f32.xlu0 %v42
    %v44 = vpop.xlane.xlu0 %43
    %v45 = vrcp.pop 32.0
    %v46 = vmul.f32 %v41, %v45
    %v47 = vmul.f32 %v44, %v45
    %v48 = vmul.f32 %v32, %v32
    %v49 = vmul.f32 %v33, %v33
    %v50 = vsel %vm38, %v48, 0.0
    %51 = vadd.xlane.f32.xlu0 %v50
    %v52 = vpop.xlane.xlu0 %51
    %v53 = vsel %vm38, %v49, 0.0
    %54 = vadd.xlane.f32.xlu0 %v53
    %v55 = vpop.xlane.xlu0 %54
    %v56 = vmul.f32 %v52, %v45
    %v57 = vmul.f32 %v55, %v45
    %v58 = vmul.f32 %v46, %v46
    %v59 = vmul.f32 %v47, %v47
    %v60 = vsub.f32 %v56, %v58
    %v61 = vsub.f32 %v57, %v59
    %v62 = vmax.f32 %v60, 0.0
    %v63 = vmax.f32 %v61, 0.0
    %v64 = vsub.f32 %v32, %v46
    %v65 = vsub.f32 %v33, %v47
    %v66 = vadd.f32 %v62, 1e-05
    %v67 = vadd.f32 %v63, 1e-05
    %v68 = vrsqrt.pop %v66
    %v69 = vrsqrt.pop %v67
    %v70 = vmul.f32 %v64, %v68
    %v71 = vmul.f32 %v65, %v69
    %v73 = vlaneseq
    %v74 = vshrl.u32 %v73, 7
    %v75 = vsub.s32 0, %v74
    %v76 = vrot.slane %v36, %v75
    %v78 = vmul.f32 %v70, %v76
    %v79 = vmul.f32 %v71, %v76
    %v81 = vlaneseq
    %v82 = vshrl.u32 %v81, 7
    %v83 = vsub.s32 0, %v82
    %v84 = vrot.slane %v37, %v83
    %v86 = vadd.f32 %v78, %v84
    %v87 = vadd.f32 %v79, %v84
    %v88 = vmul.f32 %v86, 0.4204482
    %v89 = vmul.f32 %v87, 0.4204482
    %v91 = vsel %vm38, %v88, 0
    %v94 = vsel %vm38, %v86, 0
    %96 = vmatprep.subr.mxu0 0.0
    %97 = vmatpush1.xpose.msra.mxu0 0.0
    %98 = vmatprep.subr.mxu0 0.0
    %99 = vmatpush1.xpose.msra.mxu0 0.0
    %100 = vmatprep.subr.mxu0 0.0
    %101 = vmatpush1.xpose.msra.mxu0 0.0
    %102 = vmatprep.subr.mxu0 0.0
    %103 = vmatpush1.xpose.msra.mxu0 0.0
    %104 = vmatprep.subr.mxu0 0.0
    %105 = vmatpush1.xpose.msra.mxu0 0.0
    %106 = vmatprep.subr.mxu0 0.0
    %107 = vmatpush1.xpose.msra.mxu0 0.0
    %108 = vmatprep.subr.mxu0 0.0
    %109 = vmatpush1.xpose.msra.mxu0 0.0
    %110 = vmatprep.subr.mxu0 0.0
    %111 = vmatpush1.xpose.msra.mxu0 0.0
    %112 = vmatprep.subr.mxu0 0.0
    %113 = vmatpush1.xpose.msra.mxu0 0.0
    %114 = vmatprep.subr.mxu0 0.0
    %115 = vmatpush1.xpose.msra.mxu0 0.0
    %116 = vmatprep.subr.mxu0 0.0
    %117 = vmatpush1.xpose.msra.mxu0 0.0
    %118 = vmatprep.subr.mxu0 0.0
    %119 = vmatpush1.xpose.msra.mxu0 0.0
    %120 = vmatprep.subr.mxu0 0.0
    %121 = vmatpush1.xpose.msra.mxu0 0.0
    %122 = vmatprep.subr.mxu0 0.0
    %123 = vmatpush1.xpose.msra.mxu0 0.0
    %124 = vmatprep.subr.mxu0 0.0
    %125 = vmatpush1.xpose.msra.mxu0 0.0
    %126 = vmatprep.subr.mxu0 0.0
    %127 = vmatpush1.xpose.msra.mxu0 %v94
    %128 = vmatprep.subr.mxu0 0.0
    %129 = vmatpush2.xpose.msra.mxu0 0.0
    %130 = vmatprep.subr.mxu0 0.0
    %131 = vmatpush2.xpose.msra.mxu0 0.0
    %132 = vmatprep.subr.mxu0 0.0
    %133 = vmatpush2.xpose.msra.mxu0 0.0
    %134 = vmatprep.subr.mxu0 0.0
    %135 = vmatpush2.xpose.msra.mxu0 0.0
    %136 = vmatprep.subr.mxu0 0.0
    %137 = vmatpush2.xpose.msra.mxu0 0.0
    %138 = vmatprep.subr.mxu0 0.0
    %139 = vmatpush2.xpose.msra.mxu0 0.0
    %140 = vmatprep.subr.mxu0 0.0
    %141 = vmatpush2.xpose.msra.mxu0 0.0
    %142 = vmatprep.subr.mxu0 0.0
    %143 = vmatpush2.xpose.msra.mxu0 0.0
    %144 = vmatprep.subr.mxu0 0.0
    %145 = vmatpush2.xpose.msra.mxu0 0.0
    %146 = vmatprep.subr.mxu0 0.0
    %147 = vmatpush2.xpose.msra.mxu0 0.0
    %148 = vmatprep.subr.mxu0 0.0
    %149 = vmatpush2.xpose.msra.mxu0 0.0
    %150 = vmatprep.subr.mxu0 0.0
    %151 = vmatpush2.xpose.msra.mxu0 0.0
    %152 = vmatprep.subr.mxu0 0.0
    %153 = vmatpush2.xpose.msra.mxu0 0.0
    %154 = vmatprep.subr.mxu0 0.0
    %155 = vmatpush2.xpose.msra.mxu0 0.0
    %156 = vmatprep.subr.mxu0 0.0
    %157 = vmatpush2.xpose.msra.mxu0 0.0
    %158 = vmatprep.subr.mxu0 0.0
    %159 = vmatpush2.xpose.msra.mxu0 0.0
    %160 = vmatprep.mubr.f32.mxu0 0.0
    %161 = vmatmul.mubr.f32.gmra.mxu0 %v91
    %v162 = vpop.f32.mrf.mxu0
    %v163 = vadd.f32 0.0, %v162
    %v164 = vpop.f32.mrf.mxu0
    %165 = vdwg.mxu0
    %v167 = vsel %vm38, %v89, 0
    %v170 = vsel %vm38, %v87, 0
    %172 = vmatprep.subr.mxu0 0.0
    %173 = vmatpush1.xpose.msra.mxu0 0.0
    %174 = vmatprep.subr.mxu0 0.0
    %175 = vmatpush1.xpose.msra.mxu0 0.0
    %176 = vmatprep.subr.mxu0 0.0
    %177 = vmatpush1.xpose.msra.mxu0 0.0
    %178 = vmatprep.subr.mxu0 0.0
    %179 = vmatpush1.xpose.msra.mxu0 0.0
    %180 = vmatprep.subr.mxu0 0.0
    %181 = vmatpush1.xpose.msra.mxu0 0.0
    %182 = vmatprep.subr.mxu0 0.0
    %183 = vmatpush1.xpose.msra.mxu0 0.0
    %184 = vmatprep.subr.mxu0 0.0
    %185 = vmatpush1.xpose.msra.mxu0 0.0
    %186 = vmatprep.subr.mxu0 0.0
    %187 = vmatpush1.xpose.msra.mxu0 0.0
    %188 = vmatprep.subr.mxu0 0.0
    %189 = vmatpush1.xpose.msra.mxu0 0.0
    %190 = vmatprep.subr.mxu0 0.0
    %191 = vmatpush1.xpose.msra.mxu0 0.0
    %192 = vmatprep.subr.mxu0 0.0
    %193 = vmatpush1.xpose.msra.mxu0 0.0
    %194 = vmatprep.subr.mxu0 0.0
    %195 = vmatpush1.xpose.msra.mxu0 0.0
    %196 = vmatprep.subr.mxu0 0.0
    %197 = vmatpush1.xpose.msra.mxu0 0.0
    %198 = vmatprep.subr.mxu0 0.0
    %199 = vmatpush1.xpose.msra.mxu0 0.0
    %200 = vmatprep.subr.mxu0 0.0
    %201 = vmatpush1.xpose.msra.mxu0 0.0
    %202 = vmatprep.subr.mxu0 0.0
    %203 = vmatpush1.xpose.msra.mxu0 %v170
    %204 = vmatprep.subr.mxu0 0.0
    %205 = vmatpush2.xpose.msra.mxu0 0.0
    %206 = vmatprep.subr.mxu0 0.0
    %207 = vmatpush2.xpose.msra.mxu0 0.0
    %208 = vmatprep.subr.mxu0 0.0
    %209 = vmatpush2.xpose.msra.mxu0 0.0
    %210 = vmatprep.subr.mxu0 0.0
    %211 = vmatpush2.xpose.msra.mxu0 0.0
    %212 = vmatprep.subr.mxu0 0.0
    %213 = vmatpush2.xpose.msra.mxu0 0.0
    %214 = vmatprep.subr.mxu0 0.0
    %215 = vmatpush2.xpose.msra.mxu0 0.0
    %216 = vmatprep.subr.mxu0 0.0
    %217 = vmatpush2.xpose.msra.mxu0 0.0
    %218 = vmatprep.subr.mxu0 0.0
    %219 = vmatpush2.xpose.msra.mxu0 0.0
    %220 = vmatprep.subr.mxu0 0.0
    %221 = vmatpush2.xpose.msra.mxu0 0.0
    %222 = vmatprep.subr.mxu0 0.0
    %223 = vmatpush2.xpose.msra.mxu0 0.0
    %224 = vmatprep.subr.mxu0 0.0
    %225 = vmatpush2.xpose.msra.mxu0 0.0
    %226 = vmatprep.subr.mxu0 0.0
    %227 = vmatpush2.xpose.msra.mxu0 0.0
    %228 = vmatprep.subr.mxu0 0.0
    %229 = vmatpush2.xpose.msra.mxu0 0.0
    %230 = vmatprep.subr.mxu0 0.0
    %231 = vmatpush2.xpose.msra.mxu0 0.0
    %232 = vmatprep.subr.mxu0 0.0
    %233 = vmatpush2.xpose.msra.mxu0 0.0
    %234 = vmatprep.subr.mxu0 0.0
    %235 = vmatpush2.xpose.msra.mxu0 0.0
    %236 = vmatprep.mubr.f32.mxu0 0.0
    %237 = vmatmul.mubr.f32.gmra.mxu0 %v167
    %v238 = vpop.f32.mrf.mxu0
    %v239 = vadd.f32 0.0, %v238
    %v240 = vpop.f32.mrf.mxu0
    %241 = vdwg.mxu0
    %vm242 = vcmp.gt.f32.partialorder %v34, 0.5
    %vm243 = vcmp.gt.f32.partialorder %v35, 0.5
    %v244 = vsel %vm242, 1, 0
    %v245 = vsel %vm243, 1, 0
    %v246 = vlaneseq
    %v247 = vshrl.u32 %v246, 7
    %v248 = vsub.s32 0, %v247
    %v249 = vrot.slane %v244, %v248
    %v250 = vlaneseq
    %v251 = vshrl.u32 %v250, 7
    %v252 = vsub.s32 0, %v251
    %v253 = vrot.slane %v245, %v252
    %vm254 = vcmp.eq.s32.totalorder %v249, 1
    %vm255 = vcmp.eq.s32.totalorder %v253, 1
    %v256 = vsel %vm254, %v163, -10000000.0
    %v257 = vsel %vm255, %v239, -10000000.0
    %vm258 = vcmask 64512
    %v259 = vsel %vm258, %v256, -inf
    %260 = vmax.xlane.f32.xlu0 %v259
    %v261 = vpop.xlane.xlu0 %260
    %v262 = vsel %vm258, %v257, -inf
    %263 = vmax.xlane.f32.xlu0 %v262
    %v264 = vpop.xlane.xlu0 %263
    %v265 = vsub.f32 %v256, %v261
    %v266 = vsub.f32 %v257, %v264
    %v267 = vmul.f32 %v265, 1.442695
    %v268 = vpow.pop %v267
    %v269 = vmul.f32 %v266, 1.442695
    %v270 = vpow.pop %v269
    %v271 = vsel %vm258, %v268, 0.0
    %272 = vadd.xlane.f32.xlu0 %v271
    %v273 = vpop.xlane.xlu0 %272
    %v274 = vsel %vm258, %v270, 0.0
    %275 = vadd.xlane.f32.xlu0 %v274
    %v276 = vpop.xlane.xlu0 %275
    %v277 = vrcp.pop %v273
    %v278 = vrcp.pop %v276
    %v279 = vmul.f32 %v268, %v277
    %v280 = vmul.f32 %v270, %v278
    %v282 = vsel %vm258, %v34, 0
    %284 = vmatprep.subr.mxu0 0.0
    %285 = vmatpush1.msra.mxu0 0.0
    %286 = vmatprep.subr.mxu0 0.0
    %287 = vmatpush1.msra.mxu0 0.0
    %288 = vmatprep.subr.mxu0 0.0
    %289 = vmatpush1.msra.mxu0 0.0
    %290 = vmatprep.subr.mxu0 0.0
    %291 = vmatpush1.msra.mxu0 0.0
    %292 = vmatprep.subr.mxu0 0.0
    %293 = vmatpush1.msra.mxu0 0.0
    %294 = vmatprep.subr.mxu0 0.0
    %295 = vmatpush1.msra.mxu0 0.0
    %296 = vmatprep.subr.mxu0 0.0
    %297 = vmatpush1.msra.mxu0 0.0
    %298 = vmatprep.subr.mxu0 0.0
    %299 = vmatpush1.msra.mxu0 0.0
    %300 = vmatprep.subr.mxu0 0.0
    %301 = vmatpush1.msra.mxu0 0.0
    %302 = vmatprep.subr.mxu0 0.0
    %303 = vmatpush1.msra.mxu0 0.0
    %304 = vmatprep.subr.mxu0 0.0
    %305 = vmatpush1.msra.mxu0 0.0
    %306 = vmatprep.subr.mxu0 0.0
    %307 = vmatpush1.msra.mxu0 0.0
    %308 = vmatprep.subr.mxu0 0.0
    %309 = vmatpush1.msra.mxu0 0.0
    %310 = vmatprep.subr.mxu0 0.0
    %311 = vmatpush1.msra.mxu0 0.0
    %312 = vmatprep.subr.mxu0 0.0
    %313 = vmatpush1.msra.mxu0 0.0
    %314 = vmatprep.subr.mxu0 0.0
    %315 = vmatpush1.msra.mxu0 %v279
    %316 = vmatprep.subr.mxu0 0.0
    %317 = vmatpush2.msra.mxu0 0.0
    %318 = vmatprep.subr.mxu0 0.0
    %319 = vmatpush2.msra.mxu0 0.0
    %320 = vmatprep.subr.mxu0 0.0
    %321 = vmatpush2.msra.mxu0 0.0
    %322 = vmatprep.subr.mxu0 0.0
    %323 = vmatpush2.msra.mxu0 0.0
    %324 = vmatprep.subr.mxu0 0.0
    %325 = vmatpush2.msra.mxu0 0.0
    %326 = vmatprep.subr.mxu0 0.0
    %327 = vmatpush2.msra.mxu0 0.0
    %328 = vmatprep.subr.mxu0 0.0
    %329 = vmatpush2.msra.mxu0 0.0
    %330 = vmatprep.subr.mxu0 0.0
    %331 = vmatpush2.msra.mxu0 0.0
    %332 = vmatprep.subr.mxu0 0.0
    %333 = vmatpush2.msra.mxu0 0.0
    %334 = vmatprep.subr.mxu0 0.0
    %335 = vmatpush2.msra.mxu0 0.0
    %336 = vmatprep.subr.mxu0 0.0
    %337 = vmatpush2.msra.mxu0 0.0
    %338 = vmatprep.subr.mxu0 0.0
    %339 = vmatpush2.msra.mxu0 0.0
    %340 = vmatprep.subr.mxu0 0.0
    %341 = vmatpush2.msra.mxu0 0.0
    %342 = vmatprep.subr.mxu0 0.0
    %343 = vmatpush2.msra.mxu0 0.0
    %344 = vmatprep.subr.mxu0 0.0
    %345 = vmatpush2.msra.mxu0 0.0
    %346 = vmatprep.subr.mxu0 0.0
    %347 = vmatpush2.msra.mxu0 0.0
    %348 = vmatprep.mubr.f32.mxu0 0.0
    %349 = vmatmul.mubr.f32.gmra.mxu0 %v282
    %v350 = vpop.f32.mrf.mxu0
    %v351 = vadd.f32 0.0, %v350
    %v352 = vpop.f32.mrf.mxu0
    %353 = vdwg.mxu0
    %v355 = vsel %vm258, %v35, 0
    %357 = vmatprep.subr.mxu0 0.0
    %358 = vmatpush1.msra.mxu0 0.0
    %359 = vmatprep.subr.mxu0 0.0
    %360 = vmatpush1.msra.mxu0 0.0
    %361 = vmatprep.subr.mxu0 0.0
    %362 = vmatpush1.msra.mxu0 0.0
    %363 = vmatprep.subr.mxu0 0.0
    %364 = vmatpush1.msra.mxu0 0.0
    %365 = vmatprep.subr.mxu0 0.0
    %366 = vmatpush1.msra.mxu0 0.0
    %367 = vmatprep.subr.mxu0 0.0
    %368 = vmatpush1.msra.mxu0 0.0
    %369 = vmatprep.subr.mxu0 0.0
    %370 = vmatpush1.msra.mxu0 0.0
    %371 = vmatprep.subr.mxu0 0.0
    %372 = vmatpush1.msra.mxu0 0.0
    %373 = vmatprep.subr.mxu0 0.0
    %374 = vmatpush1.msra.mxu0 0.0
    %375 = vmatprep.subr.mxu0 0.0
    %376 = vmatpush1.msra.mxu0 0.0
    %377 = vmatprep.subr.mxu0 0.0
    %378 = vmatpush1.msra.mxu0 0.0
    %379 = vmatprep.subr.mxu0 0.0
    %380 = vmatpush1.msra.mxu0 0.0
    %381 = vmatprep.subr.mxu0 0.0
    %382 = vmatpush1.msra.mxu0 0.0
    %383 = vmatprep.subr.mxu0 0.0
    %384 = vmatpush1.msra.mxu0 0.0
    %385 = vmatprep.subr.mxu0 0.0
    %386 = vmatpush1.msra.mxu0 0.0
    %387 = vmatprep.subr.mxu0 0.0
    %388 = vmatpush1.msra.mxu0 %v280
    %389 = vmatprep.subr.mxu0 0.0
    %390 = vmatpush2.msra.mxu0 0.0
    %391 = vmatprep.subr.mxu0 0.0
    %392 = vmatpush2.msra.mxu0 0.0
    %393 = vmatprep.subr.mxu0 0.0
    %394 = vmatpush2.msra.mxu0 0.0
    %395 = vmatprep.subr.mxu0 0.0
    %396 = vmatpush2.msra.mxu0 0.0
    %397 = vmatprep.subr.mxu0 0.0
    %398 = vmatpush2.msra.mxu0 0.0
    %399 = vmatprep.subr.mxu0 0.0
    %400 = vmatpush2.msra.mxu0 0.0
    %401 = vmatprep.subr.mxu0 0.0
    %402 = vmatpush2.msra.mxu0 0.0
    %403 = vmatprep.subr.mxu0 0.0
    %404 = vmatpush2.msra.mxu0 0.0
    %405 = vmatprep.subr.mxu0 0.0
    %406 = vmatpush2.msra.mxu0 0.0
    %407 = vmatprep.subr.mxu0 0.0
    %408 = vmatpush2.msra.mxu0 0.0
    %409 = vmatprep.subr.mxu0 0.0
    %410 = vmatpush2.msra.mxu0 0.0
    %411 = vmatprep.subr.mxu0 0.0
    %412 = vmatpush2.msra.mxu0 0.0
    %413 = vmatprep.subr.mxu0 0.0
    %414 = vmatpush2.msra.mxu0 0.0
    %415 = vmatprep.subr.mxu0 0.0
    %416 = vmatpush2.msra.mxu0 0.0
    %417 = vmatprep.subr.mxu0 0.0
    %418 = vmatpush2.msra.mxu0 0.0
    %419 = vmatprep.subr.mxu0 0.0
    %420 = vmatpush2.msra.mxu0 0.0
    %421 = vmatprep.mubr.f32.mxu0 0.0
    %422 = vmatmul.mubr.f32.gmra.mxu0 %v355
    %v423 = vpop.f32.mrf.mxu0
    %v424 = vadd.f32 0.0, %v423
    %v425 = vpop.f32.mrf.mxu0
    %426 = vdwg.mxu0
    %v428 = vsel %vm258, %v351, 0
    %430 = vmatprep.subr.mxu0 0.0
    %431 = vmatpush1.msra.mxu0 0.0
    %432 = vmatprep.subr.mxu0 0.0
    %433 = vmatpush1.msra.mxu0 0.0
    %434 = vmatprep.subr.mxu0 0.0
    %435 = vmatpush1.msra.mxu0 0.0
    %436 = vmatprep.subr.mxu0 0.0
    %437 = vmatpush1.msra.mxu0 0.0
    %438 = vmatprep.subr.mxu0 0.0
    %439 = vmatpush1.msra.mxu0 0.0
    %440 = vmatprep.subr.mxu0 0.0
    %441 = vmatpush1.msra.mxu0 0.0
    %442 = vmatprep.subr.mxu0 0.0
    %443 = vmatpush1.msra.mxu0 0.0
    %444 = vmatprep.subr.mxu0 0.0
    %445 = vmatpush1.msra.mxu0 0.0
    %446 = vmatprep.subr.mxu0 0.0
    %447 = vmatpush1.msra.mxu0 0.0
    %448 = vmatprep.subr.mxu0 0.0
    %449 = vmatpush1.msra.mxu0 0.0
    %450 = vmatprep.subr.mxu0 0.0
    %451 = vmatpush1.msra.mxu0 0.0
    %452 = vmatprep.subr.mxu0 0.0
    %453 = vmatpush1.msra.mxu0 0.0
    %454 = vmatprep.subr.mxu0 0.0
    %455 = vmatpush1.msra.mxu0 0.0
    %456 = vmatprep.subr.mxu0 0.0
    %457 = vmatpush1.msra.mxu0 0.0
    %458 = vmatprep.subr.mxu0 0.0
    %459 = vmatpush1.msra.mxu0 0.0
    %460 = vmatprep.subr.mxu0 0.0
    %461 = vmatpush1.msra.mxu0 %v86
    %462 = vmatprep.subr.mxu0 0.0
    %463 = vmatpush2.msra.mxu0 0.0
    %464 = vmatprep.subr.mxu0 0.0
    %465 = vmatpush2.msra.mxu0 0.0
    %466 = vmatprep.subr.mxu0 0.0
    %467 = vmatpush2.msra.mxu0 0.0
    %468 = vmatprep.subr.mxu0 0.0
    %469 = vmatpush2.msra.mxu0 0.0
    %470 = vmatprep.subr.mxu0 0.0
    %471 = vmatpush2.msra.mxu0 0.0
    %472 = vmatprep.subr.mxu0 0.0
    %473 = vmatpush2.msra.mxu0 0.0
    %474 = vmatprep.subr.mxu0 0.0
    %475 = vmatpush2.msra.mxu0 0.0
    %476 = vmatprep.subr.mxu0 0.0
    %477 = vmatpush2.msra.mxu0 0.0
    %478 = vmatprep.subr.mxu0 0.0
    %479 = vmatpush2.msra.mxu0 0.0
    %480 = vmatprep.subr.mxu0 0.0
    %481 = vmatpush2.msra.mxu0 0.0
    %482 = vmatprep.subr.mxu0 0.0
    %483 = vmatpush2.msra.mxu0 0.0
    %484 = vmatprep.subr.mxu0 0.0
    %485 = vmatpush2.msra.mxu0 0.0
    %486 = vmatprep.subr.mxu0 0.0
    %487 = vmatpush2.msra.mxu0 0.0
    %488 = vmatprep.subr.mxu0 0.0
    %489 = vmatpush2.msra.mxu0 0.0
    %490 = vmatprep.subr.mxu0 0.0
    %491 = vmatpush2.msra.mxu0 0.0
    %492 = vmatprep.subr.mxu0 0.0
    %493 = vmatpush2.msra.mxu0 0.0
    %494 = vmatprep.mubr.f32.mxu0 0.0
    %495 = vmatmul.mubr.f32.gmra.mxu0 %v428
    %v496 = vpop.f32.mrf.mxu0
    %v497 = vadd.f32 0.0, %v496
    %v498 = vpop.f32.mrf.mxu0
    %499 = vdwg.mxu0
    %v501 = vsel %vm258, %v424, 0
    %503 = vmatprep.subr.mxu0 0.0
    %504 = vmatpush1.msra.mxu0 0.0
    %505 = vmatprep.subr.mxu0 0.0
    %506 = vmatpush1.msra.mxu0 0.0
    %507 = vmatprep.subr.mxu0 0.0
    %508 = vmatpush1.msra.mxu0 0.0
    %509 = vmatprep.subr.mxu0 0.0
    %510 = vmatpush1.msra.mxu0 0.0
    %511 = vmatprep.subr.mxu0 0.0
    %512 = vmatpush1.msra.mxu0 0.0
    %513 = vmatprep.subr.mxu0 0.0
    %514 = vmatpush1.msra.mxu0 0.0
    %515 = vmatprep.subr.mxu0 0.0
    %516 = vmatpush1.msra.mxu0 0.0
    %517 = vmatprep.subr.mxu0 0.0
    %518 = vmatpush1.msra.mxu0 0.0
    %519 = vmatprep.subr.mxu0 0.0
    %520 = vmatpush1.msra.mxu0 0.0
    %521 = vmatprep.subr.mxu0 0.0
    %522 = vmatpush1.msra.mxu0 0.0
    %523 = vmatprep.subr.mxu0 0.0
    %524 = vmatpush1.msra.mxu0 0.0
    %525 = vmatprep.subr.mxu0 0.0
    %526 = vmatpush1.msra.mxu0 0.0
    %527 = vmatprep.subr.mxu0 0.0
    %528 = vmatpush1.msra.mxu0 0.0
    %529 = vmatprep.subr.mxu0 0.0
    %530 = vmatpush1.msra.mxu0 0.0
    %531 = vmatprep.subr.mxu0 0.0
    %532 = vmatpush1.msra.mxu0 0.0
    %533 = vmatprep.subr.mxu0 0.0
    %534 = vmatpush1.msra.mxu0 %v87
    %535 = vmatprep.subr.mxu0 0.0
    %536 = vmatpush2.msra.mxu0 0.0
    %537 = vmatprep.subr.mxu0 0.0
    %538 = vmatpush2.msra.mxu0 0.0
    %539 = vmatprep.subr.mxu0 0.0
    %540 = vmatpush2.msra.mxu0 0.0
    %541 = vmatprep.subr.mxu0 0.0
    %542 = vmatpush2.msra.mxu0 0.0
    %543 = vmatprep.subr.mxu0 0.0
    %544 = vmatpush2.msra.mxu0 0.0
    %545 = vmatprep.subr.mxu0 0.0
    %546 = vmatpush2.msra.mxu0 0.0
    %547 = vmatprep.subr.mxu0 0.0
    %548 = vmatpush2.msra.mxu0 0.0
    %549 = vmatprep.subr.mxu0 0.0
    %550 = vmatpush2.msra.mxu0 0.0
    %551 = vmatprep.subr.mxu0 0.0
    %552 = vmatpush2.msra.mxu0 0.0
    %553 = vmatprep.subr.mxu0 0.0
    %554 = vmatpush2.msra.mxu0 0.0
    %555 = vmatprep.subr.mxu0 0.0
    %556 = vmatpush2.msra.mxu0 0.0
    %557 = vmatprep.subr.mxu0 0.0
    %558 = vmatpush2.msra.mxu0 0.0
    %559 = vmatprep.subr.mxu0 0.0
    %560 = vmatpush2.msra.mxu0 0.0
    %561 = vmatprep.subr.mxu0 0.0
    %562 = vmatpush2.msra.mxu0 0.0
    %563 = vmatprep.subr.mxu0 0.0
    %564 = vmatpush2.msra.mxu0 0.0
    %565 = vmatprep.subr.mxu0 0.0
    %566 = vmatpush2.msra.mxu0 0.0
    %567 = vmatprep.mubr.f32.mxu0 0.0
    %568 = vmatmul.mubr.f32.gmra.mxu0 %v501
    %v569 = vpop.f32.mrf.mxu0
    %v570 = vadd.f32 0.0, %v569
    %v571 = vpop.f32.mrf.mxu0
    %572 = vdwg.mxu0
    %573 = vmatprep.subr.mxu0 0.0
    %574 = vmatpush1.msra.mxu0 0.0
    %575 = vmatprep.subr.mxu0 0.0
    %576 = vmatpush1.msra.mxu0 0.0
    %577 = vmatprep.subr.mxu0 0.0
    %578 = vmatpush1.msra.mxu0 0.0
    %579 = vmatprep.subr.mxu0 0.0
    %580 = vmatpush1.msra.mxu0 0.0
    %581 = vmatprep.subr.mxu0 0.0
    %582 = vmatpush1.msra.mxu0 0.0
    %583 = vmatprep.subr.mxu0 0.0
    %584 = vmatpush1.msra.mxu0 0.0
    %585 = vmatprep.subr.mxu0 0.0
    %586 = vmatpush1.msra.mxu0 0.0
    %587 = vmatprep.subr.mxu0 0.0
    %588 = vmatpush1.msra.mxu0 0.0
    %589 = vmatprep.subr.mxu0 0.0
    %590 = vmatpush1.msra.mxu0 0.0
    %591 = vmatprep.subr.mxu0 0.0
    %592 = vmatpush1.msra.mxu0 0.0
    %593 = vmatprep.subr.mxu0 0.0
    %594 = vmatpush1.msra.mxu0 0.0
    %595 = vmatprep.subr.mxu0 0.0
    %596 = vmatpush1.msra.mxu0 0.0
    %597 = vmatprep.subr.mxu0 0.0
    %598 = vmatpush1.msra.mxu0 0.0
    %599 = vmatprep.subr.mxu0 0.0
    %600 = vmatpush1.msra.mxu0 0.0
    %601 = vmatprep.subr.mxu0 0.0
    %602 = vmatpush1.msra.mxu0 0.0
    %603 = vmatprep.subr.mxu0 0.0
    %604 = vmatpush1.msra.mxu0 %v32
    %605 = vmatprep.subr.mxu0 0.0
    %606 = vmatpush2.msra.mxu0 0.0
    %607 = vmatprep.subr.mxu0 0.0
    %608 = vmatpush2.msra.mxu0 0.0
    %609 = vmatprep.subr.mxu0 0.0
    %610 = vmatpush2.msra.mxu0 0.0
    %611 = vmatprep.subr.mxu0 0.0
    %612 = vmatpush2.msra.mxu0 0.0
    %613 = vmatprep.subr.mxu0 0.0
    %614 = vmatpush2.msra.mxu0 0.0
    %615 = vmatprep.subr.mxu0 0.0
    %616 = vmatpush2.msra.mxu0 0.0
    %617 = vmatprep.subr.mxu0 0.0
    %618 = vmatpush2.msra.mxu0 0.0
    %619 = vmatprep.subr.mxu0 0.0
    %620 = vmatpush2.msra.mxu0 0.0
    %621 = vmatprep.subr.mxu0 0.0
    %622 = vmatpush2.msra.mxu0 0.0
    %623 = vmatprep.subr.mxu0 0.0
    %624 = vmatpush2.msra.mxu0 0.0
    %625 = vmatprep.subr.mxu0 0.0
    %626 = vmatpush2.msra.mxu0 0.0
    %627 = vmatprep.subr.mxu0 0.0
    %628 = vmatpush2.msra.mxu0 0.0
    %629 = vmatprep.subr.mxu0 0.0
    %630 = vmatpush2.msra.mxu0 0.0
    %631 = vmatprep.subr.mxu0 0.0
    %632 = vmatpush2.msra.mxu0 0.0
    %633 = vmatprep.subr.mxu0 0.0
    %634 = vmatpush2.msra.mxu0 0.0
    %635 = vmatprep.subr.mxu0 0.0
    %636 = vmatpush2.msra.mxu0 0.0
    %637 = vmatprep.mubr.f32.mxu0 0.0
    %638 = vmatmul.mubr.f32.gmra.mxu0 %v282
    %v639 = vpop.f32.mrf.mxu0
    %v640 = vadd.f32 %v497, %v639
    %v641 = vpop.f32.mrf.mxu0
    %642 = vdwg.mxu0
    %643 = vmatprep.subr.mxu0 0.0
    %644 = vmatpush1.msra.mxu0 0.0
    %645 = vmatprep.subr.mxu0 0.0
    %646 = vmatpush1.msra.mxu0 0.0
    %647 = vmatprep.subr.mxu0 0.0
    %648 = vmatpush1.msra.mxu0 0.0
    %649 = vmatprep.subr.mxu0 0.0
    %650 = vmatpush1.msra.mxu0 0.0
    %651 = vmatprep.subr.mxu0 0.0
    %652 = vmatpush1.msra.mxu0 0.0
    %653 = vmatprep.subr.mxu0 0.0
    %654 = vmatpush1.msra.mxu0 0.0
    %655 = vmatprep.subr.mxu0 0.0
    %656 = vmatpush1.msra.mxu0 0.0
    %657 = vmatprep.subr.mxu0 0.0
    %658 = vmatpush1.msra.mxu0 0.0
    %659 = vmatprep.subr.mxu0 0.0
    %660 = vmatpush1.msra.mxu0 0.0
    %661 = vmatprep.subr.mxu0 0.0
    %662 = vmatpush1.msra.mxu0 0.0
    %663 = vmatprep.subr.mxu0 0.0
    %664 = vmatpush1.msra.mxu0 0.0
    %665 = vmatprep.subr.mxu0 0.0
    %666 = vmatpush1.msra.mxu0 0.0
    %667 = vmatprep.subr.mxu0 0.0
    %668 = vmatpush1.msra.mxu0 0.0
    %669 = vmatprep.subr.mxu0 0.0
    %670 = vmatpush1.msra.mxu0 0.0
    %671 = vmatprep.subr.mxu0 0.0
    %672 = vmatpush1.msra.mxu0 0.0
    %673 = vmatprep.subr.mxu0 0.0
    %674 = vmatpush1.msra.mxu0 %v33
    %675 = vmatprep.subr.mxu0 0.0
    %676 = vmatpush2.msra.mxu0 0.0
    %677 = vmatprep.subr.mxu0 0.0
    %678 = vmatpush2.msra.mxu0 0.0
    %679 = vmatprep.subr.mxu0 0.0
    %680 = vmatpush2.msra.mxu0 0.0
    %681 = vmatprep.subr.mxu0 0.0
    %682 = vmatpush2.msra.mxu0 0.0
    %683 = vmatprep.subr.mxu0 0.0
    %684 = vmatpush2.msra.mxu0 0.0
    %685 = vmatprep.subr.mxu0 0.0
    %686 = vmatpush2.msra.mxu0 0.0
    %687 = vmatprep.subr.mxu0 0.0
    %688 = vmatpush2.msra.mxu0 0.0
    %689 = vmatprep.subr.mxu0 0.0
    %690 = vmatpush2.msra.mxu0 0.0
    %691 = vmatprep.subr.mxu0 0.0
    %692 = vmatpush2.msra.mxu0 0.0
    %693 = vmatprep.subr.mxu0 0.0
    %694 = vmatpush2.msra.mxu0 0.0
    %695 = vmatprep.subr.mxu0 0.0
    %696 = vmatpush2.msra.mxu0 0.0
    %697 = vmatprep.subr.mxu0 0.0
    %698 = vmatpush2.msra.mxu0 0.0
    %699 = vmatprep.subr.mxu0 0.0
    %700 = vmatpush2.msra.mxu0 0.0
    %701 = vmatprep.subr.mxu0 0.0
    %702 = vmatpush2.msra.mxu0 0.0
    %703 = vmatprep.subr.mxu0 0.0
    %704 = vmatpush2.msra.mxu0 0.0
    %705 = vmatprep.subr.mxu0 0.0
    %706 = vmatpush2.msra.mxu0 0.0
    %707 = vmatprep.mubr.f32.mxu0 0.0
    %708 = vmatmul.mubr.f32.gmra.mxu0 %v355
    %v709 = vpop.f32.mrf.mxu0
    %v710 = vadd.f32 %v570, %v709
    %v711 = vpop.f32.mrf.mxu0
    %712 = vdwg.mxu0
    %v713 = vmul.f32 %v640, %v640
    %v714 = vmul.f32 %v710, %v710
    %vm715 = vcmask 253952
    %v716 = vsel %vm715, %v713, 0.0
    %717 = vadd.xlane.f32.xlu0 %v716
    %v718 = vpop.xlane.xlu0 %717
    %v719 = vsel %vm715, %v714, 0.0
    %720 = vadd.xlane.f32.xlu0 %v719
    %v721 = vpop.xlane.xlu0 %720
    %v722 = vrsqrt.pop %v718
    %v723 = vrsqrt.pop %v721
    %v724 = vmul.f32 %v640, %v722
    %v725 = vmul.f32 %v710, %v723
    %726 = vst.msk [vmem:[#allocation5] sm:$0x1] %vm715, %v724
    %727 = vst.msk [vmem:[#allocation5 + $0x1] sm:$0x1] %vm715, %v725
    // Predicated region
    $region22: #{token_seq_layer.1} parent=1 // pred_check
      _
    $region23: #{token_seq_layer.1} parent=1 // pred_check_branch
      %729 = sbr.rel (0) target = $region25
    $region24: #{token_seq_layer.1} parent=1 // pred_region
      %s731 = ssub.s32 32, 32
      %732 = vsyncadd [#allocation4], %s731
      %s733 = sshll.u32 [#allocation5], 4
      %s734 = int_to_ptr.vmem [resolvable:$true] %s733
      %739 = dma.vmem_to_hbm [thread:$0]  %s734, 32, %s4, [#allocation4], 16, 16, 1
    $region25: #{token_seq_layer.1} parent=1 // pred_fallthru
      _
    // Predicated region
    $region26: #{token_seq_layer.1} parent=1 // pred_check
      _
    $region27: #{token_seq_layer.1} parent=1 // pred_check_branch
      %741 = sbr.rel (0) target = $region29
    $region28: #{token_seq_layer.1} parent=1 // pred_region
      %742 = dma.done [#allocation4], 32
    $region29: #{token_seq_layer.1} parent=1 // pred_fallthru
      _
    %743 = vsyncpa [#allocation3], 1
    %744 = vsyncpa [#allocation4], 1

</llo_original>
